<compile_context>
chip_gen: v6e
topology: v6e:2x2x1
jax: 0.10.0
libtpu: 0.0.40
codegen_flags: <defaults>
</compile_context>

<pallas_src>
import functools

import jax
import jax.numpy as jnp
from jax.experimental import pallas as pl
from jax.experimental.pallas import tpu as pltpu


def _chebnet_fused_kernel(lhat_ref, x_ref, w10_ref, w11_ref, b1_ref,
                          w20_ref, w21_ref, b2_ref, o_ref):
    """Fused 2-layer ChebConv (K=2) forward over the whole graph.

    lhat_ref: (N, N)    bf16  scaled Laplacian  -D^{-1/2} A D^{-1/2}
    x_ref:    (N, Fin)  bf16  node features
    w10_ref:  (Fin, H)  bf16  conv1 W[0]
    w11_ref:  (Fin, H)  bf16  conv1 W[1]
    b1_ref:   (1, H)    f32   conv1 bias
    w20_ref:  (H, C)    bf16  conv2 W[0]
    w21_ref:  (H, C)    bf16  conv2 W[1]
    b2_ref:   (1, C)    f32   conv2 bias
    o_ref:    (N, C)    f32   output logits
    """
    lhat = lhat_ref[...]                                            # (N, N)   bf16
    x = x_ref[...]                                                  # (N, Fin) bf16

    # ---- layer 1: h = relu(x @ W1_0 + (L_hat @ x) @ W1_1 + b1) ----
    # L_hat @ x first (the NxN matmul runs at width Fin=16, not H=32), then
    # two separate MXU pushes; no lane concat / relayout.
    lx = jnp.dot(lhat, x, preferred_element_type=jnp.float32)       # (N, Fin) f32
    h = (jnp.dot(x, w10_ref[...], preferred_element_type=jnp.float32)
         + jnp.dot(lx.astype(jnp.bfloat16), w11_ref[...],
                   preferred_element_type=jnp.float32)
         + b1_ref[...])                                             # (N, H) f32
    h = jnp.maximum(h, 0.0)
    # TODO(synk): F.dropout(p=0.5) is identity in eval mode; training-mode
    # stochastic dropout (pltpu.prng_seed / prng_random_bits) not applied.
    h_bf = h.astype(jnp.bfloat16)

    # ---- layer 2: out = h @ W2_0 + L_hat @ (h @ W2_1) + b2 ----
    # Project h down first (C=8 < H=32) so the big NxN matmul runs at width C;
    # separate W2_0 / W2_1 refs avoid any lane-offset slicing.
    hw0 = jnp.dot(h_bf, w20_ref[...], preferred_element_type=jnp.float32)  # (N, C)
    hw1 = jnp.dot(h_bf, w21_ref[...], preferred_element_type=jnp.float32)  # (N, C)
    t = jnp.dot(lhat, hw1.astype(jnp.bfloat16),
                preferred_element_type=jnp.float32)                         # (N, C)
    o_ref[...] = (hw0 + t + b2_ref[...]).astype(o_ref.dtype)


def prepare_graph(lhat, x):
    """One-time f32 -> bf16 cast of the (large) graph operands."""
    return lhat.astype(jnp.bfloat16), x.astype(jnp.bfloat16)


def prepare_params(params):
    """One-time cast/reshape of weights & biases (hoisted out of the forward)."""
    return {
        "w1_0": params["w1_0"].astype(jnp.bfloat16),
        "w1_1": params["w1_1"].astype(jnp.bfloat16),
        "b1": params["b1"].reshape(1, -1).astype(jnp.float32),
        "w2_0": params["w2_0"].astype(jnp.bfloat16),
        "w2_1": params["w2_1"].astype(jnp.bfloat16),
        "b2": params["b2"].reshape(1, -1).astype(jnp.float32),
    }


@functools.partial(jax.jit, static_argnames=())
def chebnet_forward(lhat_bf, x_bf, p):
    """Fused ChebNet forward.  All inputs are already in kernel dtypes."""
    n, fin = x_bf.shape
    h_feats = p["w1_0"].shape[1]
    num_classes = p["w2_0"].shape[1]

    # Whole graph in one grid step: everything (~100 KB) fits VMEM easily and
    # the problem is launch/DMA-bound, so a single fused step wins.
    # TODO(synk): large-N path — row-tile lhat/x ("parallel" leading axis for
    # megacore / v7x's 2 TCs) with the K/column reduction axis LAST and
    # "arbitrary", f32 VMEM accumulator scratch; re-derive tile sizes per
    # generation (v7x: 64 MiB physical VMEM, v5e: 16 MiB scoped default) and
    # set vmem_limit_bytes explicitly in CompilerParams.
    return pl.pallas_call(
        _chebnet_fused_kernel,
        out_shape=jax.ShapeDtypeStruct((n, num_classes), jnp.float32),
        grid_spec=pltpu.PrefetchScalarGridSpec(
            num_scalar_prefetch=0,
            grid=(1,),
            in_specs=[
                pl.BlockSpec((n, n), lambda i: (0, 0)),                    # L_hat
                pl.BlockSpec((n, fin), lambda i: (0, 0)),                  # X
                pl.BlockSpec((fin, h_feats), lambda i: (0, 0)),            # W1_0
                pl.BlockSpec((fin, h_feats), lambda i: (0, 0)),            # W1_1
                pl.BlockSpec((1, h_feats), lambda i: (0, 0)),              # b1
                pl.BlockSpec((h_feats, num_classes), lambda i: (0, 0)),    # W2_0
                pl.BlockSpec((h_feats, num_classes), lambda i: (0, 0)),    # W2_1
                pl.BlockSpec((1, num_classes), lambda i: (0, 0)),          # b2
            ],
            out_specs=pl.BlockSpec((n, num_classes), lambda i: (0, 0)),
        ),
        compiler_params=pltpu.CompilerParams(
            dimension_semantics=("arbitrary",)),
    )(lhat_bf, x_bf, p["w1_0"], p["w1_1"], p["b1"],
      p["w2_0"], p["w2_1"], p["b2"])


def _glorot(key, shape):
    fan_in, fan_out = shape
    limit = jnp.sqrt(6.0 / (fan_in + fan_out))
    return jax.random.uniform(key, shape, jnp.float32, -limit, limit)


def _build_graph_laplacian(key, n_nodes):
    """Dense L_hat = -D^{-1/2} A D^{-1/2} for a deterministic synthetic graph."""
    # ring graph + a few random symmetric edges
    idx = jnp.arange(n_nodes)
    adj = jnp.zeros((n_nodes, n_nodes), jnp.float32)
    adj = adj.at[idx, (idx + 1) % n_nodes].set(1.0)
    adj = adj.at[(idx + 1) % n_nodes, idx].set(1.0)
    extra = jax.random.randint(key, (2, 4 * n_nodes), 0, n_nodes)
    adj = adj.at[extra[0], extra[1]].set(1.0)
    adj = jnp.maximum(adj, adj.T)
    adj = adj * (1.0 - jnp.eye(n_nodes, dtype=jnp.float32))  # no self loops

    deg = adj.sum(axis=1)
    dinv_sqrt = jnp.where(deg > 0, 1.0 / jnp.sqrt(deg), 0.0)
    lhat = -(dinv_sqrt[:, None] * adj * dinv_sqrt[None, :])
    return lhat


if __name__ == "__main__":
    N = 128            # number of graph nodes
    IN_FEATS = 16
    H_FEATS = 32
    NUM_CLASSES = 8

    root = jax.random.PRNGKey(0)
    kg, kx, k10, k11, k20, k21 = jax.random.split(root, 6)

    lhat = _build_graph_laplacian(kg, N)
    x = jax.random.normal(kx, (N, IN_FEATS), jnp.float32)

    params = {
        # ChebConv1: weight (K=2, in_feats, h_feats), bias zeros
        "w1_0": _glorot(k10, (IN_FEATS, H_FEATS)),
        "w1_1": _glorot(k11, (IN_FEATS, H_FEATS)),
        "b1": jnp.zeros((H_FEATS,), jnp.float32),
        # ChebConv2: weight (K=2, h_feats, num_classes), bias zeros
        "w2_0": _glorot(k20, (H_FEATS, NUM_CLASSES)),
        "w2_1": _glorot(k21, (H_FEATS, NUM_CLASSES)),
        "b2": jnp.zeros((NUM_CLASSES,), jnp.float32),
    }

    # One-time host-side prep (casts / reshapes hoisted out of the forward).
    lhat_bf, x_bf = prepare_graph(lhat, x)
    p = prepare_params(params)

    out = jax.block_until_ready(chebnet_forward(lhat_bf, x_bf, p))

    # pure-JAX f32 reference for correctness (kernel uses bf16 MXU inputs with
    # f32 accumulation, hence the relaxed tolerance).
    def ref_layer(xx, w0, w1, b, relu):
        o = xx @ w0 + (lhat @ xx) @ w1 + b
        return jnp.maximum(o, 0.0) if relu else o

    h_ref = ref_layer(x, params["w1_0"], params["w1_1"], params["b1"], True)
    out_ref = ref_layer(h_ref, params["w2_0"], params["w2_1"], params["b2"], False)

    assert out.shape == (N, NUM_CLASSES)
    assert jnp.allclose(out, out_ref, atol=5e-2, rtol=5e-2), (
        float(jnp.max(jnp.abs(out - out_ref))))
    print("KERNEL_OK")
</pallas_src>

<mosaic_0001>
module attributes {stable_mosaic.version = 11 : i64} {
  func.func @_chebnet_fused_kernel(%arg0: i32, %arg1: memref<128x128xbf16, #tpu.memory_space<vmem>>, %arg2: memref<128x16xbf16, #tpu.memory_space<vmem>>, %arg3: memref<16x32xbf16, #tpu.memory_space<vmem>>, %arg4: memref<16x32xbf16, #tpu.memory_space<vmem>>, %arg5: memref<1x32xf32, #tpu.memory_space<vmem>>, %arg6: memref<32x8xbf16, #tpu.memory_space<vmem>>, %arg7: memref<32x8xbf16, #tpu.memory_space<vmem>>, %arg8: memref<1x8xf32, #tpu.memory_space<vmem>>, %arg9: memref<128x8xf32, #tpu.memory_space<vmem>>) attributes {dimension_semantics = [#tpu.dimension_semantics<arbitrary>], iteration_bounds = array<i64: 1>, scalar_prefetch = 0 : i64, scratch_operands = 0 : i64, tpu.core_type = #tpu.core_type<tc>, window_params = [{pipeline_mode = #tpu.pipeline_mode<synchronous>, transform_indices = @transform_0, window_bounds = array<i64: 128, 128>}, {pipeline_mode = #tpu.pipeline_mode<synchronous>, transform_indices = @transform_1, window_bounds = array<i64: 128, 16>}, {pipeline_mode = #tpu.pipeline_mode<synchronous>, transform_indices = @transform_2, window_bounds = array<i64: 16, 32>}, {pipeline_mode = #tpu.pipeline_mode<synchronous>, transform_indices = @transform_3, window_bounds = array<i64: 16, 32>}, {pipeline_mode = #tpu.pipeline_mode<synchronous>, transform_indices = @transform_4, window_bounds = array<i64: 1, 32>}, {pipeline_mode = #tpu.pipeline_mode<synchronous>, transform_indices = @transform_5, window_bounds = array<i64: 32, 8>}, {pipeline_mode = #tpu.pipeline_mode<synchronous>, transform_indices = @transform_6, window_bounds = array<i64: 32, 8>}, {pipeline_mode = #tpu.pipeline_mode<synchronous>, transform_indices = @transform_7, window_bounds = array<i64: 1, 8>}, {pipeline_mode = #tpu.pipeline_mode<synchronous>, transform_indices = @transform_8, window_bounds = array<i64: 128, 8>}]} {
    %c0 = arith.constant 0 : index
    %c0_0 = arith.constant 0 : index
    %0 = vector.load %arg1[%c0, %c0_0] : memref<128x128xbf16, #tpu.memory_space<vmem>>, vector<128x128xbf16>
    %c0_1 = arith.constant 0 : index
    %c0_2 = arith.constant 0 : index
    %1 = vector.load %arg2[%c0_1, %c0_2] : memref<128x16xbf16, #tpu.memory_space<vmem>>, vector<128x16xbf16>
    %cst = arith.constant dense<0.000000e+00> : vector<128x16xf32>
    %2 = tpu.matmul %0, %1, %cst {dimension_numbers = #tpu.dot_dimension_numbers<[1], [0], [0], [1], [0, 0, 1, 1], [], []>} : vector<128x128xbf16>, vector<128x16xbf16>, vector<128x16xf32> -> vector<128x16xf32>
    %c0_3 = arith.constant 0 : index
    %c0_4 = arith.constant 0 : index
    %3 = vector.load %arg3[%c0_3, %c0_4] : memref<16x32xbf16, #tpu.memory_space<vmem>>, vector<16x32xbf16>
    %cst_5 = arith.constant dense<0.000000e+00> : vector<128x32xf32>
    %4 = tpu.matmul %1, %3, %cst_5 {dimension_numbers = #tpu.dot_dimension_numbers<[1], [0], [0], [1], [0, 0, 1, 1], [], []>} : vector<128x16xbf16>, vector<16x32xbf16>, vector<128x32xf32> -> vector<128x32xf32>
    %5 = arith.truncf %2 : vector<128x16xf32> to vector<128x16xbf16>
    %c0_6 = arith.constant 0 : index
    %c0_7 = arith.constant 0 : index
    %6 = vector.load %arg4[%c0_6, %c0_7] : memref<16x32xbf16, #tpu.memory_space<vmem>>, vector<16x32xbf16>
    %cst_8 = arith.constant dense<0.000000e+00> : vector<128x32xf32>
    %7 = tpu.matmul %5, %6, %cst_8 {dimension_numbers = #tpu.dot_dimension_numbers<[1], [0], [0], [1], [0, 0, 1, 1], [], []>} : vector<128x16xbf16>, vector<16x32xbf16>, vector<128x32xf32> -> vector<128x32xf32>
    %8 = arith.addf %4, %7 : vector<128x32xf32>
    %c0_9 = arith.constant 0 : index
    %c0_10 = arith.constant 0 : index
    %9 = vector.load %arg5[%c0_9, %c0_10] : memref<1x32xf32, #tpu.memory_space<vmem>>, vector<1x32xf32>
    %10 = vector.broadcast %9 : vector<1x32xf32> to vector<128x32xf32>
    %11 = arith.addf %8, %10 : vector<128x32xf32>
    %cst_11 = arith.constant 0.000000e+00 : f32
    %12 = vector.broadcast %cst_11 : f32 to vector<128x32xf32>
    %13 = arith.maximumf %11, %12 : vector<128x32xf32>
    %14 = arith.truncf %13 : vector<128x32xf32> to vector<128x32xbf16>
    %c0_12 = arith.constant 0 : index
    %c0_13 = arith.constant 0 : index
    %15 = vector.load %arg6[%c0_12, %c0_13] : memref<32x8xbf16, #tpu.memory_space<vmem>>, vector<32x8xbf16>
    %cst_14 = arith.constant dense<0.000000e+00> : vector<128x8xf32>
    %16 = tpu.matmul %14, %15, %cst_14 {dimension_numbers = #tpu.dot_dimension_numbers<[1], [0], [0], [1], [0, 0, 1, 1], [], []>} : vector<128x32xbf16>, vector<32x8xbf16>, vector<128x8xf32> -> vector<128x8xf32>
    %c0_15 = arith.constant 0 : index
    %c0_16 = arith.constant 0 : index
    %17 = vector.load %arg7[%c0_15, %c0_16] : memref<32x8xbf16, #tpu.memory_space<vmem>>, vector<32x8xbf16>
    %cst_17 = arith.constant dense<0.000000e+00> : vector<128x8xf32>
    %18 = tpu.matmul %14, %17, %cst_17 {dimension_numbers = #tpu.dot_dimension_numbers<[1], [0], [0], [1], [0, 0, 1, 1], [], []>} : vector<128x32xbf16>, vector<32x8xbf16>, vector<128x8xf32> -> vector<128x8xf32>
    %19 = arith.truncf %18 : vector<128x8xf32> to vector<128x8xbf16>
    %cst_18 = arith.constant dense<0.000000e+00> : vector<128x8xf32>
    %20 = tpu.matmul %0, %19, %cst_18 {dimension_numbers = #tpu.dot_dimension_numbers<[1], [0], [0], [1], [0, 0, 1, 1], [], []>} : vector<128x128xbf16>, vector<128x8xbf16>, vector<128x8xf32> -> vector<128x8xf32>
    %21 = arith.addf %16, %20 : vector<128x8xf32>
    %c0_19 = arith.constant 0 : index
    %c0_20 = arith.constant 0 : index
    %22 = vector.load %arg8[%c0_19, %c0_20] : memref<1x8xf32, #tpu.memory_space<vmem>>, vector<1x8xf32>
    %23 = vector.broadcast %22 : vector<1x8xf32> to vector<128x8xf32>
    %24 = arith.addf %21, %23 : vector<128x8xf32>
    %c0_21 = arith.constant 0 : index
    %c0_22 = arith.constant 0 : index
    %25 = vector.load %arg9[%c0_21, %c0_22] : memref<128x8xf32, #tpu.memory_space<vmem>>, vector<128x8xf32>
    tpu.vector_store %arg9[%c0_21, %c0_22], %24 {strides = array<i32>} : memref<128x8xf32, #tpu.memory_space<vmem>>, vector<128x8xf32>,
    return
  }
  func.func @transform_0(%arg0: i32) -> (i32, i32) {
    %c0_i32 = arith.constant 0 : i32
    %c0_i32_0 = arith.constant 0 : i32
    %c0_i32_1 = arith.constant 0 : i32
    return %c0_i32, %c0_i32_0 : i32, i32
  }
  func.func @transform_1(%arg0: i32) -> (i32, i32) {
    %c0_i32 = arith.constant 0 : i32
    %c0_i32_0 = arith.constant 0 : i32
    %c0_i32_1 = arith.constant 0 : i32
    return %c0_i32, %c0_i32_0 : i32, i32
  }
  func.func @transform_2(%arg0: i32) -> (i32, i32) {
    %c0_i32 = arith.constant 0 : i32
    %c0_i32_0 = arith.constant 0 : i32
    %c0_i32_1 = arith.constant 0 : i32
    return %c0_i32, %c0_i32_0 : i32, i32
  }
  func.func @transform_3(%arg0: i32) -> (i32, i32) {
    %c0_i32 = arith.constant 0 : i32
    %c0_i32_0 = arith.constant 0 : i32
    %c0_i32_1 = arith.constant 0 : i32
    return %c0_i32, %c0_i32_0 : i32, i32
  }
  func.func @transform_4(%arg0: i32) -> (i32, i32) {
    %c0_i32 = arith.constant 0 : i32
    %c0_i32_0 = arith.constant 0 : i32
    %c0_i32_1 = arith.constant 0 : i32
    return %c0_i32, %c0_i32_0 : i32, i32
  }
  func.func @transform_5(%arg0: i32) -> (i32, i32) {
    %c0_i32 = arith.constant 0 : i32
    %c0_i32_0 = arith.constant 0 : i32
    %c0_i32_1 = arith.constant 0 : i32
    return %c0_i32, %c0_i32_0 : i32, i32
  }
  func.func @transform_6(%arg0: i32) -> (i32, i32) {
    %c0_i32 = arith.constant 0 : i32
    %c0_i32_0 = arith.constant 0 : i32
    %c0_i32_1 = arith.constant 0 : i32
    return %c0_i32, %c0_i32_0 : i32, i32
  }
  func.func @transform_7(%arg0: i32) -> (i32, i32) {
    %c0_i32 = arith.constant 0 : i32
    %c0_i32_0 = arith.constant 0 : i32
    %c0_i32_1 = arith.constant 0 : i32
    return %c0_i32, %c0_i32_0 : i32, i32
  }
  func.func @transform_8(%arg0: i32) -> (i32, i32) {
    %c0_i32 = arith.constant 0 : i32
    %c0_i32_0 = arith.constant 0 : i32
    %c0_i32_1 = arith.constant 0 : i32
    return %c0_i32, %c0_i32_0 : i32, i32
  }
}

</mosaic_0001>

<llo_original>
// kernel: chebnet_forward.1
$region0: #{chebnet_forward.1}
  #allocation0 [shape = 'u32[]', space=smem, size = 0x4, offset = 0x4, fixed_abs, tag = 'smem constant byte address 0x4 - core index']
  #allocation1 [shape = 'u32[144,128]{1,0:T(1,128)}', space=vmem, size = 0x12000, scoped, tag = 'internal scratch']
  %s0 = inlined_call_operand.vmem [shape: bf16[128,128], index: 0, kind: input, shape index: {}]
  %s1 = inlined_call_operand.vmem [shape: bf16[128,16], index: 1, kind: input, shape index: {}]
  %s2 = inlined_call_operand.vmem [shape: bf16[16,32], index: 2, kind: input, shape index: {}]
  %s3 = inlined_call_operand.vmem [shape: bf16[16,32], index: 3, kind: input, shape index: {}]
  %s4 = inlined_call_operand.vmem [shape: f32[1,32], index: 4, kind: input, shape index: {}]
  %s5 = inlined_call_operand.vmem [shape: bf16[32,8], index: 5, kind: input, shape index: {}]
  %s6 = inlined_call_operand.vmem [shape: bf16[32,8], index: 6, kind: input, shape index: {}]
  %s7 = inlined_call_operand.vmem [shape: f32[1,8], index: 7, kind: input, shape index: {}]
  %s8 = inlined_call_operand.vmem [shape: f32[128,8], index: 8, kind: output, shape index: {}]
  %s9 = sld [smem:[#allocation0]]
  $region42: #{chebnet_forward.1} parent=0
    _
  %s11 = ssub.s32 1, %s9
  %s12 = scalar_select 0, %s11, %s9
  // Predicated region
  $region2: #{chebnet_forward.1} parent=0 // pred_check
    _
  $region3: #{chebnet_forward.1} parent=0 // pred_check_branch
    %14 = sbr.rel (0) target = $region5
  $region4: #{chebnet_forward.1} parent=0 // pred_region
    _
  $region5: #{chebnet_forward.1} parent=0 // pred_fallthru
    _
  // Predicated region
  $region6: #{chebnet_forward.1} parent=0 // pred_check
    _
  $region7: #{chebnet_forward.1} parent=0 // pred_check_branch
    %16 = sbr.rel (0) target = $region9
  $region8: #{chebnet_forward.1} parent=0 // pred_region
    _
  $region9: #{chebnet_forward.1} parent=0 // pred_fallthru
    _
  // Predicated region
  $region10: #{chebnet_forward.1} parent=0 // pred_check
    _
  $region11: #{chebnet_forward.1} parent=0 // pred_check_branch
    %18 = sbr.rel (0) target = $region13
  $region12: #{chebnet_forward.1} parent=0 // pred_region
    _
  $region13: #{chebnet_forward.1} parent=0 // pred_fallthru
    _
  // Predicated region
  $region14: #{chebnet_forward.1} parent=0 // pred_check
    _
  $region15: #{chebnet_forward.1} parent=0 // pred_check_branch
    %20 = sbr.rel (0) target = $region17
  $region16: #{chebnet_forward.1} parent=0 // pred_region
    _
  $region17: #{chebnet_forward.1} parent=0 // pred_fallthru
    _
  // Predicated region
  $region18: #{chebnet_forward.1} parent=0 // pred_check
    _
  $region19: #{chebnet_forward.1} parent=0 // pred_check_branch
    %22 = sbr.rel (0) target = $region21
  $region20: #{chebnet_forward.1} parent=0 // pred_region
    _
  $region21: #{chebnet_forward.1} parent=0 // pred_fallthru
    _
  // Predicated region
  $region22: #{chebnet_forward.1} parent=0 // pred_check
    _
  $region23: #{chebnet_forward.1} parent=0 // pred_check_branch
    %24 = sbr.rel (0) target = $region25
  $region24: #{chebnet_forward.1} parent=0 // pred_region
    _
  $region25: #{chebnet_forward.1} parent=0 // pred_fallthru
    _
  // Predicated region
  $region26: #{chebnet_forward.1} parent=0 // pred_check
    _
  $region27: #{chebnet_forward.1} parent=0 // pred_check_branch
    %26 = sbr.rel (0) target = $region29
  $region28: #{chebnet_forward.1} parent=0 // pred_region
    _
  $region29: #{chebnet_forward.1} parent=0 // pred_fallthru
    _
  // Predicated region
  $region30: #{chebnet_forward.1} parent=0 // pred_check
    _
  $region31: #{chebnet_forward.1} parent=0 // pred_check_branch
    %28 = sbr.rel (0) target = $region33
  $region32: #{chebnet_forward.1} parent=0 // pred_region
    _
  $region33: #{chebnet_forward.1} parent=0 // pred_fallthru
    _
  %v30 = vld [vmem:[%s0] sm:$0xf]
  %v31 = vld [vmem:[%s0 + $0x4] sm:$0xf]
  %v32 = vld [vmem:[%s0 + $0x8] sm:$0xf]
  %v33 = vld [vmem:[%s0 + $0xc] sm:$0xf]
  %v34 = vld [vmem:[%s0 + $0x10] sm:$0xf]
  %v35 = vld [vmem:[%s0 + $0x14] sm:$0xf]
  %v36 = vld [vmem:[%s0 + $0x18] sm:$0xf]
  %v37 = vld [vmem:[%s0 + $0x1c] sm:$0xf]
  %v38 = vld [vmem:[%s0 + $0x20] sm:$0xf]
  %v39 = vld [vmem:[%s0 + $0x24] sm:$0xf]
  %v40 = vld [vmem:[%s0 + $0x28] sm:$0xf]
  %v41 = vld [vmem:[%s0 + $0x2c] sm:$0xf]
  %v42 = vld [vmem:[%s0 + $0x30] sm:$0xf]
  %v43 = vld [vmem:[%s0 + $0x34] sm:$0xf]
  %v44 = vld [vmem:[%s0 + $0x38] sm:$0xf]
  %v45 = vld [vmem:[%s0 + $0x3c] sm:$0xf]
  %v46 = vld [vmem:[%s1] sm:$0xf]
  %v47 = vld [vmem:[%s1 + $0x4] sm:$0xf]
  %v48 = vld [vmem:[%s1 + $0x8] sm:$0xf]
  %v49 = vld [vmem:[%s1 + $0xc] sm:$0xf]
  %v50 = vld [vmem:[%s1 + $0x10] sm:$0xf]
  %v51 = vld [vmem:[%s1 + $0x14] sm:$0xf]
  %v52 = vld [vmem:[%s1 + $0x18] sm:$0xf]
  %v53 = vld [vmem:[%s1 + $0x1c] sm:$0xf]
  %v54 = vld [vmem:[%s1 + $0x20] sm:$0xf]
  %v55 = vld [vmem:[%s1 + $0x24] sm:$0xf]
  %v56 = vld [vmem:[%s1 + $0x28] sm:$0xf]
  %v57 = vld [vmem:[%s1 + $0x2c] sm:$0xf]
  %v58 = vld [vmem:[%s1 + $0x30] sm:$0xf]
  %v59 = vld [vmem:[%s1 + $0x34] sm:$0xf]
  %v60 = vld [vmem:[%s1 + $0x38] sm:$0xf]
  %v61 = vld [vmem:[%s1 + $0x3c] sm:$0xf]
  %v78 = vunpack.c.l.b16 %v30
  %v79 = vunpack.c.l.b16 %v31
  %v80 = vunpack.c.l.b16 %v32
  %v81 = vunpack.c.l.b16 %v33
  %v82 = vunpack.c.l.b16 %v34
  %v83 = vunpack.c.l.b16 %v35
  %v84 = vunpack.c.l.b16 %v36
  %v85 = vunpack.c.l.b16 %v37
  %v86 = vunpack.c.l.b16 %v38
  %v87 = vunpack.c.l.b16 %v39
  %v88 = vunpack.c.l.b16 %v40
  %v89 = vunpack.c.l.b16 %v41
  %v90 = vunpack.c.l.b16 %v42
  %v91 = vunpack.c.l.b16 %v43
  %v92 = vunpack.c.l.b16 %v44
  %v93 = vunpack.c.l.b16 %v45
  %v94 = vpack.c.b16 %v79, %v78
  %v95 = vpack.c.b16 %v81, %v80
  %v96 = vpack.c.b16 %v83, %v82
  %v97 = vpack.c.b16 %v85, %v84
  %v98 = vpack.c.b16 %v87, %v86
  %v99 = vpack.c.b16 %v89, %v88
  %v100 = vpack.c.b16 %v91, %v90
  %v101 = vpack.c.b16 %v93, %v92
  %v126 = vunpack.c.l.b16 %v46
  %v127 = vunpack.c.l.b16 %v47
  %v128 = vunpack.c.l.b16 %v48
  %v129 = vunpack.c.l.b16 %v49
  %v130 = vunpack.c.l.b16 %v50
  %v131 = vunpack.c.l.b16 %v51
  %v132 = vunpack.c.l.b16 %v52
  %v133 = vunpack.c.l.b16 %v53
  %v134 = vunpack.c.l.b16 %v54
  %v135 = vunpack.c.l.b16 %v55
  %v136 = vunpack.c.l.b16 %v56
  %v137 = vunpack.c.l.b16 %v57
  %v138 = vunpack.c.l.b16 %v58
  %v139 = vunpack.c.l.b16 %v59
  %v140 = vunpack.c.l.b16 %v60
  %v141 = vunpack.c.l.b16 %v61
  %v142 = vpack.c.b16 %v127, %v126
  %v143 = vpack.c.b16 %v129, %v128
  %v144 = vpack.c.b16 %v131, %v130
  %v145 = vpack.c.b16 %v133, %v132
  %v146 = vpack.c.b16 %v135, %v134
  %v147 = vpack.c.b16 %v137, %v136
  %v148 = vpack.c.b16 %v139, %v138
  %v149 = vpack.c.b16 %v141, %v140
  %158 = vmatprep.subr.bf16.mxu0 0
  %159 = vmatpush1.bf16.msra.mxu0 %v149
  %160 = vmatprep.subr.bf16.mxu0 0
  %161 = vmatpush1.bf16.msra.mxu0 %v148
  %162 = vmatprep.subr.bf16.mxu0 0
  %163 = vmatpush1.bf16.msra.mxu0 %v147
  %164 = vmatprep.subr.bf16.mxu0 0
  %165 = vmatpush1.bf16.msra.mxu0 %v146
  %166 = vmatprep.subr.bf16.mxu0 0
  %167 = vmatpush1.bf16.msra.mxu0 %v145
  %168 = vmatprep.subr.bf16.mxu0 0
  %169 = vmatpush1.bf16.msra.mxu0 %v144
  %170 = vmatprep.subr.bf16.mxu0 0
  %171 = vmatpush1.bf16.msra.mxu0 %v143
  %172 = vmatprep.subr.bf16.mxu0 0
  %173 = vmatpush1.bf16.msra.mxu0 %v142
  %174 = vmatprep.subr.bf16.mxu0 0
  %175 = vmatpush2.bf16.msra.mxu0 0
  %176 = vmatprep.subr.bf16.mxu0 0
  %177 = vmatpush2.bf16.msra.mxu0 0
  %178 = vmatprep.subr.bf16.mxu0 0
  %179 = vmatpush2.bf16.msra.mxu0 0
  %180 = vmatprep.subr.bf16.mxu0 0
  %181 = vmatpush2.bf16.msra.mxu0 0
  %182 = vmatprep.subr.bf16.mxu0 0
  %183 = vmatpush2.bf16.msra.mxu0 0
  %184 = vmatprep.subr.bf16.mxu0 0
  %185 = vmatpush2.bf16.msra.mxu0 0
  %186 = vmatprep.subr.bf16.mxu0 0
  %187 = vmatpush2.bf16.msra.mxu0 0
  %188 = vmatprep.subr.bf16.mxu0 0
  %189 = vmatpush2.bf16.msra.mxu0 0
  %190 = vmatprep.mubr.bf16.mxu0 0
  %191 = vmatmul.mubr.bf16.gmra.mxu0 %v94
  %v192 = vpop.f32.mrf.mxu0
  %v193 = vadd.f32 0.0, %v192
  %v194 = vpop.f32.mrf.mxu0
  %v195 = vpop.f32.mrf.mxu0
  %v196 = vadd.f32 0.0, %v195
  %v197 = vpop.f32.mrf.mxu0
  %198 = vmatprep.mubr.bf16.mxu0 0
  %199 = vmatmul.mubr.bf16.gmra.mxu0 %v95
  %v200 = vpop.f32.mrf.mxu0
  %v201 = vadd.f32 0.0, %v200
  %v202 = vpop.f32.mrf.mxu0
  %v203 = vpop.f32.mrf.mxu0
  %v204 = vadd.f32 0.0, %v203
  %v205 = vpop.f32.mrf.mxu0
  %206 = vmatprep.mubr.bf16.mxu0 0
  %207 = vmatmul.mubr.bf16.gmra.mxu0 %v96
  %v208 = vpop.f32.mrf.mxu0
  %v209 = vadd.f32 0.0, %v208
  %v210 = vpop.f32.mrf.mxu0
  %v211 = vpop.f32.mrf.mxu0
  %v212 = vadd.f32 0.0, %v211
  %v213 = vpop.f32.mrf.mxu0
  %214 = vmatprep.mubr.bf16.mxu0 0
  %215 = vmatmul.mubr.bf16.gmra.mxu0 %v97
  %v216 = vpop.f32.mrf.mxu0
  %v217 = vadd.f32 0.0, %v216
  %v218 = vpop.f32.mrf.mxu0
  %v219 = vpop.f32.mrf.mxu0
  %v220 = vadd.f32 0.0, %v219
  %v221 = vpop.f32.mrf.mxu0
  %222 = vmatprep.mubr.bf16.mxu0 0
  %223 = vmatmul.mubr.bf16.gmra.mxu0 %v98
  %v224 = vpop.f32.mrf.mxu0
  %v225 = vadd.f32 0.0, %v224
  %v226 = vpop.f32.mrf.mxu0
  %v227 = vpop.f32.mrf.mxu0
  %v228 = vadd.f32 0.0, %v227
  %v229 = vpop.f32.mrf.mxu0
  %230 = vmatprep.mubr.bf16.mxu0 0
  %231 = vmatmul.mubr.bf16.gmra.mxu0 %v99
  %v232 = vpop.f32.mrf.mxu0
  %v233 = vadd.f32 0.0, %v232
  %v234 = vpop.f32.mrf.mxu0
  %v235 = vpop.f32.mrf.mxu0
  %v236 = vadd.f32 0.0, %v235
  %v237 = vpop.f32.mrf.mxu0
  %238 = vmatprep.mubr.bf16.mxu0 0
  %239 = vmatmul.mubr.bf16.gmra.mxu0 %v100
  %v240 = vpop.f32.mrf.mxu0
  %v241 = vadd.f32 0.0, %v240
  %v242 = vpop.f32.mrf.mxu0
  %v243 = vpop.f32.mrf.mxu0
  %v244 = vadd.f32 0.0, %v243
  %v245 = vpop.f32.mrf.mxu0
  %246 = vmatprep.mubr.bf16.mxu0 0
  %247 = vmatmul.mubr.bf16.gmra.mxu0 %v101
  %v248 = vpop.f32.mrf.mxu0
  %v249 = vadd.f32 0.0, %v248
  %v250 = vpop.f32.mrf.mxu0
  %v251 = vpop.f32.mrf.mxu0
  %v252 = vadd.f32 0.0, %v251
  %v253 = vpop.f32.mrf.mxu0
  %254 = vdwg.mxu0
  %v255 = vld [vmem:[%s2] sm:$0xf]
  %v256 = vld [vmem:[%s2 + $0x4] sm:$0xf]
  %v257 = vpack.c.bf16 %v196, %v193
  %v258 = vpack.c.bf16 %v204, %v201
  %v259 = vpack.c.bf16 %v212, %v209
  %v260 = vpack.c.bf16 %v220, %v217
  %v261 = vpack.c.bf16 %v228, %v225
  %v262 = vpack.c.bf16 %v236, %v233
  %v263 = vpack.c.bf16 %v244, %v241
  %v264 = vpack.c.bf16 %v252, %v249
  %v265 = vld [vmem:[%s3] sm:$0xf]
  %v266 = vld [vmem:[%s3 + $0x4] sm:$0xf]
  %v269 = vunpack.c.l.b16 %v265
  %v270 = vunpack.c.l.b16 %v266
  %v271 = vpack.c.b16 %v270, %v269
  %vm273 = vcmask 130048
  %v275 = vsel %vm273, %v257, 0
  %v278 = vsel %vm273, %v258, 0
  %v281 = vsel %vm273, %v259, 0
  %v284 = vsel %vm273, %v260, 0
  %v287 = vsel %vm273, %v261, 0
  %v290 = vsel %vm273, %v262, 0
  %v293 = vsel %vm273, %v263, 0
  %v296 = vsel %vm273, %v264, 0
  %298 = vmatprep.subr.bf16.mxu0 0
  %299 = vmatpush1.bf16.msra.mxu0 0
  %300 = vmatprep.subr.bf16.mxu0 0
  %301 = vmatpush1.bf16.msra.mxu0 0
  %302 = vmatprep.subr.bf16.mxu0 0
  %303 = vmatpush1.bf16.msra.mxu0 0
  %304 = vmatprep.subr.bf16.mxu0 0
  %305 = vmatpush1.bf16.msra.mxu0 0
  %306 = vmatprep.subr.bf16.mxu0 0
  %307 = vmatpush1.bf16.msra.mxu0 0
  %308 = vmatprep.subr.bf16.mxu0 0
  %309 = vmatpush1.bf16.msra.mxu0 0
  %310 = vmatprep.subr.bf16.mxu0 0
  %311 = vmatpush1.bf16.msra.mxu0 0
  %312 = vmatprep.subr.bf16.mxu0 0
  %313 = vmatpush1.bf16.msra.mxu0 %v271
  %314 = vmatprep.subr.bf16.mxu0 0
  %315 = vmatpush2.bf16.msra.mxu0 0
  %316 = vmatprep.subr.bf16.mxu0 0
  %317 = vmatpush2.bf16.msra.mxu0 0
  %318 = vmatprep.subr.bf16.mxu0 0
  %319 = vmatpush2.bf16.msra.mxu0 0
  %320 = vmatprep.subr.bf16.mxu0 0
  %321 = vmatpush2.bf16.msra.mxu0 0
  %322 = vmatprep.subr.bf16.mxu0 0
  %323 = vmatpush2.bf16.msra.mxu0 0
  %324 = vmatprep.subr.bf16.mxu0 0
  %325 = vmatpush2.bf16.msra.mxu0 0
  %326 = vmatprep.subr.bf16.mxu0 0
  %327 = vmatpush2.bf16.msra.mxu0 0
  %328 = vmatprep.subr.bf16.mxu0 0
  %329 = vmatpush2.bf16.msra.mxu0 0
  %330 = vmatprep.mubr.bf16.mxu0 0
  %331 = vmatmul.mubr.bf16.gmra.mxu0 %v275
  %v332 = vpop.f32.mrf.mxu0
  %v333 = vadd.f32 0.0, %v332
  %v334 = vpop.f32.mrf.mxu0
  %v335 = vpop.f32.mrf.mxu0
  %v336 = vadd.f32 0.0, %v335
  %v337 = vpop.f32.mrf.mxu0
  %338 = vmatprep.mubr.bf16.mxu0 0
  %339 = vmatmul.mubr.bf16.gmra.mxu0 %v278
  %v340 = vpop.f32.mrf.mxu0
  %v341 = vadd.f32 0.0, %v340
  %v342 = vpop.f32.mrf.mxu0
  %v343 = vpop.f32.mrf.mxu0
  %v344 = vadd.f32 0.0, %v343
  %v345 = vpop.f32.mrf.mxu0
  %346 = vmatprep.mubr.bf16.mxu0 0
  %347 = vmatmul.mubr.bf16.gmra.mxu0 %v281
  %v348 = vpop.f32.mrf.mxu0
  %v349 = vadd.f32 0.0, %v348
  %v350 = vpop.f32.mrf.mxu0
  %v351 = vpop.f32.mrf.mxu0
  %v352 = vadd.f32 0.0, %v351
  %v353 = vpop.f32.mrf.mxu0
  %354 = vmatprep.mubr.bf16.mxu0 0
  %355 = vmatmul.mubr.bf16.gmra.mxu0 %v284
  %v356 = vpop.f32.mrf.mxu0
  %v357 = vadd.f32 0.0, %v356
  %v358 = vpop.f32.mrf.mxu0
  %v359 = vpop.f32.mrf.mxu0
  %v360 = vadd.f32 0.0, %v359
  %v361 = vpop.f32.mrf.mxu0
  %362 = vmatprep.mubr.bf16.mxu0 0
  %363 = vmatmul.mubr.bf16.gmra.mxu0 %v287
  %v364 = vpop.f32.mrf.mxu0
  %v365 = vadd.f32 0.0, %v364
  %v366 = vpop.f32.mrf.mxu0
  %v367 = vpop.f32.mrf.mxu0
  %v368 = vadd.f32 0.0, %v367
  %v369 = vpop.f32.mrf.mxu0
  %370 = vmatprep.mubr.bf16.mxu0 0
  %371 = vmatmul.mubr.bf16.gmra.mxu0 %v290
  %v372 = vpop.f32.mrf.mxu0
  %v373 = vadd.f32 0.0, %v372
  %v374 = vpop.f32.mrf.mxu0
  %v375 = vpop.f32.mrf.mxu0
  %v376 = vadd.f32 0.0, %v375
  %v377 = vpop.f32.mrf.mxu0
  %378 = vmatprep.mubr.bf16.mxu0 0
  %379 = vmatmul.mubr.bf16.gmra.mxu0 %v293
  %v380 = vpop.f32.mrf.mxu0
  %v381 = vadd.f32 0.0, %v380
  %v382 = vpop.f32.mrf.mxu0
  %v383 = vpop.f32.mrf.mxu0
  %v384 = vadd.f32 0.0, %v383
  %v385 = vpop.f32.mrf.mxu0
  %386 = vmatprep.mubr.bf16.mxu0 0
  %387 = vmatmul.mubr.bf16.gmra.mxu0 %v296
  %v388 = vpop.f32.mrf.mxu0
  %v389 = vadd.f32 0.0, %v388
  %v390 = vpop.f32.mrf.mxu0
  %v391 = vpop.f32.mrf.mxu0
  %v392 = vadd.f32 0.0, %v391
  %v393 = vpop.f32.mrf.mxu0
  %394 = vdwg.mxu0
  %v397 = vunpack.c.l.b16 %v255
  %v398 = vunpack.c.l.b16 %v256
  %v399 = vpack.c.b16 %v398, %v397
  %v402 = vsel %vm273, %v142, 0
  %v405 = vsel %vm273, %v143, 0
  %v408 = vsel %vm273, %v144, 0
  %v411 = vsel %vm273, %v145, 0
  %v414 = vsel %vm273, %v146, 0
  %v417 = vsel %vm273, %v147, 0
  %v420 = vsel %vm273, %v148, 0
  %v423 = vsel %vm273, %v149, 0
  %425 = vmatprep.subr.bf16.mxu0 0
  %426 = vmatpush1.bf16.msra.mxu0 0
  %427 = vmatprep.subr.bf16.mxu0 0
  %428 = vmatpush1.bf16.msra.mxu0 0
  %429 = vmatprep.subr.bf16.mxu0 0
  %430 = vmatpush1.bf16.msra.mxu0 0
  %431 = vmatprep.subr.bf16.mxu0 0
  %432 = vmatpush1.bf16.msra.mxu0 0
  %433 = vmatprep.subr.bf16.mxu0 0
  %434 = vmatpush1.bf16.msra.mxu0 0
  %435 = vmatprep.subr.bf16.mxu0 0
  %436 = vmatpush1.bf16.msra.mxu0 0
  %437 = vmatprep.subr.bf16.mxu0 0
  %438 = vmatpush1.bf16.msra.mxu0 0
  %439 = vmatprep.subr.bf16.mxu0 0
  %440 = vmatpush1.bf16.msra.mxu0 %v399
  %441 = vmatprep.subr.bf16.mxu0 0
  %442 = vmatpush2.bf16.msra.mxu0 0
  %443 = vmatprep.subr.bf16.mxu0 0
  %444 = vmatpush2.bf16.msra.mxu0 0
  %445 = vmatprep.subr.bf16.mxu0 0
  %446 = vmatpush2.bf16.msra.mxu0 0
  %447 = vmatprep.subr.bf16.mxu0 0
  %448 = vmatpush2.bf16.msra.mxu0 0
  %449 = vmatprep.subr.bf16.mxu0 0
  %450 = vmatpush2.bf16.msra.mxu0 0
  %451 = vmatprep.subr.bf16.mxu0 0
  %452 = vmatpush2.bf16.msra.mxu0 0
  %453 = vmatprep.subr.bf16.mxu0 0
  %454 = vmatpush2.bf16.msra.mxu0 0
  %455 = vmatprep.subr.bf16.mxu0 0
  %456 = vmatpush2.bf16.msra.mxu0 0
  %457 = vmatprep.mubr.bf16.mxu0 0
  %458 = vmatmul.mubr.bf16.gmra.mxu0 %v402
  %v459 = vpop.f32.mrf.mxu0
  %v460 = vadd.f32 %v333, %v459
  %v461 = vpop.f32.mrf.mxu0
  %v462 = vpop.f32.mrf.mxu0
  %v463 = vadd.f32 %v336, %v462
  %v464 = vpop.f32.mrf.mxu0
  %465 = vmatprep.mubr.bf16.mxu0 0
  %466 = vmatmul.mubr.bf16.gmra.mxu0 %v405
  %v467 = vpop.f32.mrf.mxu0
  %v468 = vadd.f32 %v341, %v467
  %v469 = vpop.f32.mrf.mxu0
  %v470 = vpop.f32.mrf.mxu0
  %v471 = vadd.f32 %v344, %v470
  %v472 = vpop.f32.mrf.mxu0
  %473 = vmatprep.mubr.bf16.mxu0 0
  %474 = vmatmul.mubr.bf16.gmra.mxu0 %v408
  %v475 = vpop.f32.mrf.mxu0
  %v476 = vadd.f32 %v349, %v475
  %v477 = vpop.f32.mrf.mxu0
  %v478 = vpop.f32.mrf.mxu0
  %v479 = vadd.f32 %v352, %v478
  %v480 = vpop.f32.mrf.mxu0
  %481 = vmatprep.mubr.bf16.mxu0 0
  %482 = vmatmul.mubr.bf16.gmra.mxu0 %v411
  %v483 = vpop.f32.mrf.mxu0
  %v484 = vadd.f32 %v357, %v483
  %v485 = vpop.f32.mrf.mxu0
  %v486 = vpop.f32.mrf.mxu0
  %v487 = vadd.f32 %v360, %v486
  %v488 = vpop.f32.mrf.mxu0
  %489 = vmatprep.mubr.bf16.mxu0 0
  %490 = vmatmul.mubr.bf16.gmra.mxu0 %v414
  %v491 = vpop.f32.mrf.mxu0
  %v492 = vadd.f32 %v365, %v491
  %v493 = vpop.f32.mrf.mxu0
  %v494 = vpop.f32.mrf.mxu0
  %v495 = vadd.f32 %v368, %v494
  %v496 = vpop.f32.mrf.mxu0
  %497 = vmatprep.mubr.bf16.mxu0 0
  %498 = vmatmul.mubr.bf16.gmra.mxu0 %v417
  %v499 = vpop.f32.mrf.mxu0
  %v500 = vadd.f32 %v373, %v499
  %v501 = vpop.f32.mrf.mxu0
  %v502 = vpop.f32.mrf.mxu0
  %v503 = vadd.f32 %v376, %v502
  %v504 = vpop.f32.mrf.mxu0
  %505 = vmatprep.mubr.bf16.mxu0 0
  %506 = vmatmul.mubr.bf16.gmra.mxu0 %v420
  %v507 = vpop.f32.mrf.mxu0
  %v508 = vadd.f32 %v381, %v507
  %v509 = vpop.f32.mrf.mxu0
  %v510 = vpop.f32.mrf.mxu0
  %v511 = vadd.f32 %v384, %v510
  %v512 = vpop.f32.mrf.mxu0
  %513 = vmatprep.mubr.bf16.mxu0 0
  %514 = vmatmul.mubr.bf16.gmra.mxu0 %v423
  %v515 = vpop.f32.mrf.mxu0
  %v516 = vadd.f32 %v389, %v515
  %v517 = vpop.f32.mrf.mxu0
  %v518 = vpop.f32.mrf.mxu0
  %v519 = vadd.f32 %v392, %v518
  %v520 = vpop.f32.mrf.mxu0
  %521 = vdwg.mxu0
  %v522 = vld [vmem:[%s4] sm:$0x1]
  %v524 = vlaneseq
  %v525 = vshrl.u32 %v524, 7
  %v526 = vsub.s32 0, %v525
  %v527 = vrot.slane %v522, %v526
  %v529 = vadd.f32 %v460, %v527
  %v530 = vadd.f32 %v463, %v527
  %v531 = vadd.f32 %v468, %v527
  %v532 = vadd.f32 %v471, %v527
  %v533 = vadd.f32 %v476, %v527
  %v534 = vadd.f32 %v479, %v527
  %v535 = vadd.f32 %v484, %v527
  %v536 = vadd.f32 %v487, %v527
  %v537 = vadd.f32 %v492, %v527
  %v538 = vadd.f32 %v495, %v527
  %v539 = vadd.f32 %v500, %v527
  %v540 = vadd.f32 %v503, %v527
  %v541 = vadd.f32 %v508, %v527
  %v542 = vadd.f32 %v511, %v527
  %v543 = vadd.f32 %v516, %v527
  %v544 = vadd.f32 %v519, %v527
  %v545 = vmax.f32 %v529, 0.0
  %v546 = vmax.f32 %v530, 0.0
  %v547 = vmax.f32 %v531, 0.0
  %v548 = vmax.f32 %v532, 0.0
  %v549 = vmax.f32 %v533, 0.0
  %v550 = vmax.f32 %v534, 0.0
  %v551 = vmax.f32 %v535, 0.0
  %v552 = vmax.f32 %v536, 0.0
  %v553 = vmax.f32 %v537, 0.0
  %v554 = vmax.f32 %v538, 0.0
  %v555 = vmax.f32 %v539, 0.0
  %v556 = vmax.f32 %v540, 0.0
  %v557 = vmax.f32 %v541, 0.0
  %v558 = vmax.f32 %v542, 0.0
  %v559 = vmax.f32 %v543, 0.0
  %v560 = vmax.f32 %v544, 0.0
  %v561 = vpack.c.bf16 %v546, %v545
  %v562 = vpack.c.bf16 %v548, %v547
  %v563 = vpack.c.bf16 %v550, %v549
  %v564 = vpack.c.bf16 %v552, %v551
  %v565 = vpack.c.bf16 %v554, %v553
  %v566 = vpack.c.bf16 %v556, %v555
  %v567 = vpack.c.bf16 %v558, %v557
  %v568 = vpack.c.bf16 %v560, %v559
  %v569 = vld [vmem:[%s5] sm:$0xf]
  %v570 = vld [vmem:[%s5 + $0x4] sm:$0xf]
  %v571 = vld [vmem:[%s5 + $0x8] sm:$0xf]
  %v572 = vld [vmem:[%s5 + $0xc] sm:$0xf]
  %v573 = vld [vmem:[%s6] sm:$0xf]
  %v574 = vld [vmem:[%s6 + $0x4] sm:$0xf]
  %v575 = vld [vmem:[%s6 + $0x8] sm:$0xf]
  %v576 = vld [vmem:[%s6 + $0xc] sm:$0xf]
  %v581 = vunpack.c.l.b16 %v573
  %v582 = vunpack.c.l.b16 %v574
  %v583 = vunpack.c.l.b16 %v575
  %v584 = vunpack.c.l.b16 %v576
  %v585 = vpack.c.b16 %v582, %v581
  %v586 = vpack.c.b16 %v584, %v583
  %vm589 = vcmask 261120
  %v591 = vsel %vm589, %v561, 0
  %v594 = vsel %vm589, %v562, 0
  %v597 = vsel %vm589, %v563, 0
  %v600 = vsel %vm589, %v564, 0
  %v603 = vsel %vm589, %v565, 0
  %v606 = vsel %vm589, %v566, 0
  %v609 = vsel %vm589, %v567, 0
  %v612 = vsel %vm589, %v568, 0
  %614 = vmatprep.subr.bf16.mxu0 0
  %615 = vmatpush1.bf16.msra.mxu0 0
  %616 = vmatprep.subr.bf16.mxu0 0
  %617 = vmatpush1.bf16.msra.mxu0 0
  %618 = vmatprep.subr.bf16.mxu0 0
  %619 = vmatpush1.bf16.msra.mxu0 0
  %620 = vmatprep.subr.bf16.mxu0 0
  %621 = vmatpush1.bf16.msra.mxu0 0
  %622 = vmatprep.subr.bf16.mxu0 0
  %623 = vmatpush1.bf16.msra.mxu0 0
  %624 = vmatprep.subr.bf16.mxu0 0
  %625 = vmatpush1.bf16.msra.mxu0 0
  %626 = vmatprep.subr.bf16.mxu0 0
  %627 = vmatpush1.bf16.msra.mxu0 %v586
  %628 = vmatprep.subr.bf16.mxu0 0
  %629 = vmatpush1.bf16.msra.mxu0 %v585
  %630 = vmatprep.subr.bf16.mxu0 0
  %631 = vmatpush2.bf16.msra.mxu0 0
  %632 = vmatprep.subr.bf16.mxu0 0
  %633 = vmatpush2.bf16.msra.mxu0 0
  %634 = vmatprep.subr.bf16.mxu0 0
  %635 = vmatpush2.bf16.msra.mxu0 0
  %636 = vmatprep.subr.bf16.mxu0 0
  %637 = vmatpush2.bf16.msra.mxu0 0
  %638 = vmatprep.subr.bf16.mxu0 0
  %639 = vmatpush2.bf16.msra.mxu0 0
  %640 = vmatprep.subr.bf16.mxu0 0
  %641 = vmatpush2.bf16.msra.mxu0 0
  %642 = vmatprep.subr.bf16.mxu0 0
  %643 = vmatpush2.bf16.msra.mxu0 0
  %644 = vmatprep.subr.bf16.mxu0 0
  %645 = vmatpush2.bf16.msra.mxu0 0
  %646 = vmatprep.mubr.bf16.mxu0 0
  %647 = vmatmul.mubr.bf16.gmra.mxu0 %v591
  %v648 = vpop.f32.mrf.mxu0
  %v649 = vadd.f32 0.0, %v648
  %v650 = vpop.f32.mrf.mxu0
  %v651 = vpop.f32.mrf.mxu0
  %v652 = vadd.f32 0.0, %v651
  %v653 = vpop.f32.mrf.mxu0
  %654 = vmatprep.mubr.bf16.mxu0 0
  %655 = vmatmul.mubr.bf16.gmra.mxu0 %v594
  %v656 = vpop.f32.mrf.mxu0
  %v657 = vadd.f32 0.0, %v656
  %v658 = vpop.f32.mrf.mxu0
  %v659 = vpop.f32.mrf.mxu0
  %v660 = vadd.f32 0.0, %v659
  %v661 = vpop.f32.mrf.mxu0
  %662 = vmatprep.mubr.bf16.mxu0 0
  %663 = vmatmul.mubr.bf16.gmra.mxu0 %v597
  %v664 = vpop.f32.mrf.mxu0
  %v665 = vadd.f32 0.0, %v664
  %v666 = vpop.f32.mrf.mxu0
  %v667 = vpop.f32.mrf.mxu0
  %v668 = vadd.f32 0.0, %v667
  %v669 = vpop.f32.mrf.mxu0
  %670 = vmatprep.mubr.bf16.mxu0 0
  %671 = vmatmul.mubr.bf16.gmra.mxu0 %v600
  %v672 = vpop.f32.mrf.mxu0
  %v673 = vadd.f32 0.0, %v672
  %v674 = vpop.f32.mrf.mxu0
  %v675 = vpop.f32.mrf.mxu0
  %v676 = vadd.f32 0.0, %v675
  %v677 = vpop.f32.mrf.mxu0
  %678 = vmatprep.mubr.bf16.mxu0 0
  %679 = vmatmul.mubr.bf16.gmra.mxu0 %v603
  %v680 = vpop.f32.mrf.mxu0
  %v681 = vadd.f32 0.0, %v680
  %v682 = vpop.f32.mrf.mxu0
  %v683 = vpop.f32.mrf.mxu0
  %v684 = vadd.f32 0.0, %v683
  %v685 = vpop.f32.mrf.mxu0
  %686 = vmatprep.mubr.bf16.mxu0 0
  %687 = vmatmul.mubr.bf16.gmra.mxu0 %v606
  %v688 = vpop.f32.mrf.mxu0
  %v689 = vadd.f32 0.0, %v688
  %v690 = vpop.f32.mrf.mxu0
  %v691 = vpop.f32.mrf.mxu0
  %v692 = vadd.f32 0.0, %v691
  %v693 = vpop.f32.mrf.mxu0
  %694 = vmatprep.mubr.bf16.mxu0 0
  %695 = vmatmul.mubr.bf16.gmra.mxu0 %v609
  %v696 = vpop.f32.mrf.mxu0
  %v697 = vadd.f32 0.0, %v696
  %v698 = vpop.f32.mrf.mxu0
  %v699 = vpop.f32.mrf.mxu0
  %v700 = vadd.f32 0.0, %v699
  %v701 = vpop.f32.mrf.mxu0
  %702 = vmatprep.mubr.bf16.mxu0 0
  %703 = vmatmul.mubr.bf16.gmra.mxu0 %v612
  %v704 = vpop.f32.mrf.mxu0
  %v705 = vadd.f32 0.0, %v704
  %v706 = vpop.f32.mrf.mxu0
  %v707 = vpop.f32.mrf.mxu0
  %v708 = vadd.f32 0.0, %v707
  %v709 = vpop.f32.mrf.mxu0
  %710 = vdwg.mxu0
  %v711 = vpack.c.bf16 %v652, %v649
  %v712 = vpack.c.bf16 %v660, %v657
  %v713 = vpack.c.bf16 %v668, %v665
  %v714 = vpack.c.bf16 %v676, %v673
  %v715 = vpack.c.bf16 %v684, %v681
  %v716 = vpack.c.bf16 %v692, %v689
  %v717 = vpack.c.bf16 %v700, %v697
  %v718 = vpack.c.bf16 %v708, %v705
  %719 = vmatprep.subr.bf16.mxu0 0
  %720 = vmatpush1.bf16.msra.mxu0 %v718
  %721 = vmatprep.subr.bf16.mxu0 0
  %722 = vmatpush1.bf16.msra.mxu0 %v717
  %723 = vmatprep.subr.bf16.mxu0 0
  %724 = vmatpush1.bf16.msra.mxu0 %v716
  %725 = vmatprep.subr.bf16.mxu0 0
  %726 = vmatpush1.bf16.msra.mxu0 %v715
  %727 = vmatprep.subr.bf16.mxu0 0
  %728 = vmatpush1.bf16.msra.mxu0 %v714
  %729 = vmatprep.subr.bf16.mxu0 0
  %730 = vmatpush1.bf16.msra.mxu0 %v713
  %731 = vmatprep.subr.bf16.mxu0 0
  %732 = vmatpush1.bf16.msra.mxu0 %v712
  %733 = vmatprep.subr.bf16.mxu0 0
  %734 = vmatpush1.bf16.msra.mxu0 %v711
  %735 = vmatprep.subr.bf16.mxu0 0
  %736 = vmatpush2.bf16.msra.mxu0 0
  %737 = vmatprep.subr.bf16.mxu0 0
  %738 = vmatpush2.bf16.msra.mxu0 0
  %739 = vmatprep.subr.bf16.mxu0 0
  %740 = vmatpush2.bf16.msra.mxu0 0
  %741 = vmatprep.subr.bf16.mxu0 0
  %742 = vmatpush2.bf16.msra.mxu0 0
  %743 = vmatprep.subr.bf16.mxu0 0
  %744 = vmatpush2.bf16.msra.mxu0 0
  %745 = vmatprep.subr.bf16.mxu0 0
  %746 = vmatpush2.bf16.msra.mxu0 0
  %747 = vmatprep.subr.bf16.mxu0 0
  %748 = vmatpush2.bf16.msra.mxu0 0
  %749 = vmatprep.subr.bf16.mxu0 0
  %750 = vmatpush2.bf16.msra.mxu0 0
  %751 = vmatprep.mubr.bf16.mxu0 0
  %752 = vmatmul.mubr.bf16.gmra.mxu0 %v94
  %v753 = vpop.f32.mrf.mxu0
  %v754 = vadd.f32 0.0, %v753
  %v755 = vpop.f32.mrf.mxu0
  %v756 = vpop.f32.mrf.mxu0
  %v757 = vadd.f32 0.0, %v756
  %v758 = vpop.f32.mrf.mxu0
  %759 = vmatprep.mubr.bf16.mxu0 0
  %760 = vmatmul.mubr.bf16.gmra.mxu0 %v95
  %v761 = vpop.f32.mrf.mxu0
  %v762 = vadd.f32 0.0, %v761
  %v763 = vpop.f32.mrf.mxu0
  %v764 = vpop.f32.mrf.mxu0
  %v765 = vadd.f32 0.0, %v764
  %v766 = vpop.f32.mrf.mxu0
  %767 = vmatprep.mubr.bf16.mxu0 0
  %768 = vmatmul.mubr.bf16.gmra.mxu0 %v96
  %v769 = vpop.f32.mrf.mxu0
  %v770 = vadd.f32 0.0, %v769
  %v771 = vpop.f32.mrf.mxu0
  %v772 = vpop.f32.mrf.mxu0
  %v773 = vadd.f32 0.0, %v772
  %v774 = vpop.f32.mrf.mxu0
  %775 = vmatprep.mubr.bf16.mxu0 0
  %776 = vmatmul.mubr.bf16.gmra.mxu0 %v97
  %v777 = vpop.f32.mrf.mxu0
  %v778 = vadd.f32 0.0, %v777
  %v779 = vpop.f32.mrf.mxu0
  %v780 = vpop.f32.mrf.mxu0
  %v781 = vadd.f32 0.0, %v780
  %v782 = vpop.f32.mrf.mxu0
  %783 = vmatprep.mubr.bf16.mxu0 0
  %784 = vmatmul.mubr.bf16.gmra.mxu0 %v98
  %v785 = vpop.f32.mrf.mxu0
  %v786 = vadd.f32 0.0, %v785
  %v787 = vpop.f32.mrf.mxu0
  %v788 = vpop.f32.mrf.mxu0
  %v789 = vadd.f32 0.0, %v788
  %v790 = vpop.f32.mrf.mxu0
  %791 = vmatprep.mubr.bf16.mxu0 0
  %792 = vmatmul.mubr.bf16.gmra.mxu0 %v99
  %v793 = vpop.f32.mrf.mxu0
  %v794 = vadd.f32 0.0, %v793
  %v795 = vpop.f32.mrf.mxu0
  %v796 = vpop.f32.mrf.mxu0
  %v797 = vadd.f32 0.0, %v796
  %v798 = vpop.f32.mrf.mxu0
  %799 = vmatprep.mubr.bf16.mxu0 0
  %800 = vmatmul.mubr.bf16.gmra.mxu0 %v100
  %v801 = vpop.f32.mrf.mxu0
  %v802 = vadd.f32 0.0, %v801
  %v803 = vpop.f32.mrf.mxu0
  %v804 = vpop.f32.mrf.mxu0
  %v805 = vadd.f32 0.0, %v804
  %v806 = vpop.f32.mrf.mxu0
  %807 = vmatprep.mubr.bf16.mxu0 0
  %808 = vmatmul.mubr.bf16.gmra.mxu0 %v101
  %v809 = vpop.f32.mrf.mxu0
  %v810 = vadd.f32 0.0, %v809
  %v811 = vpop.f32.mrf.mxu0
  %v812 = vpop.f32.mrf.mxu0
  %v813 = vadd.f32 0.0, %v812
  %v814 = vpop.f32.mrf.mxu0
  %815 = vdwg.mxu0
  %v820 = vunpack.c.l.b16 %v569
  %v821 = vunpack.c.l.b16 %v570
  %v822 = vunpack.c.l.b16 %v571
  %v823 = vunpack.c.l.b16 %v572
  %v824 = vpack.c.b16 %v821, %v820
  %v825 = vpack.c.b16 %v823, %v822
  %828 = vmatprep.subr.bf16.mxu0 0
  %829 = vmatpush1.bf16.msra.mxu0 0
  %830 = vmatprep.subr.bf16.mxu0 0
  %831 = vmatpush1.bf16.msra.mxu0 0
  %832 = vmatprep.subr.bf16.mxu0 0
  %833 = vmatpush1.bf16.msra.mxu0 0
  %834 = vmatprep.subr.bf16.mxu0 0
  %835 = vmatpush1.bf16.msra.mxu0 0
  %836 = vmatprep.subr.bf16.mxu0 0
  %837 = vmatpush1.bf16.msra.mxu0 0
  %838 = vmatprep.subr.bf16.mxu0 0
  %839 = vmatpush1.bf16.msra.mxu0 0
  %840 = vmatprep.subr.bf16.mxu0 0
  %841 = vmatpush1.bf16.msra.mxu0 %v825
  %842 = vmatprep.subr.bf16.mxu0 0
  %843 = vmatpush1.bf16.msra.mxu0 %v824
  %844 = vmatprep.subr.bf16.mxu0 0
  %845 = vmatpush2.bf16.msra.mxu0 0
  %846 = vmatprep.subr.bf16.mxu0 0
  %847 = vmatpush2.bf16.msra.mxu0 0
  %848 = vmatprep.subr.bf16.mxu0 0
  %849 = vmatpush2.bf16.msra.mxu0 0
  %850 = vmatprep.subr.bf16.mxu0 0
  %851 = vmatpush2.bf16.msra.mxu0 0
  %852 = vmatprep.subr.bf16.mxu0 0
  %853 = vmatpush2.bf16.msra.mxu0 0
  %854 = vmatprep.subr.bf16.mxu0 0
  %855 = vmatpush2.bf16.msra.mxu0 0
  %856 = vmatprep.subr.bf16.mxu0 0
  %857 = vmatpush2.bf16.msra.mxu0 0
  %858 = vmatprep.subr.bf16.mxu0 0
  %859 = vmatpush2.bf16.msra.mxu0 0
  %860 = vmatprep.mubr.bf16.mxu0 0
  %861 = vmatmul.mubr.bf16.gmra.mxu0 %v591
  %v862 = vpop.f32.mrf.mxu0
  %v863 = vadd.f32 %v754, %v862
  %v864 = vpop.f32.mrf.mxu0
  %v865 = vpop.f32.mrf.mxu0
  %v866 = vadd.f32 %v757, %v865
  %v867 = vpop.f32.mrf.mxu0
  %868 = vmatprep.mubr.bf16.mxu0 0
  %869 = vmatmul.mubr.bf16.gmra.mxu0 %v594
  %v870 = vpop.f32.mrf.mxu0
  %v871 = vadd.f32 %v762, %v870
  %v872 = vpop.f32.mrf.mxu0
  %v873 = vpop.f32.mrf.mxu0
  %v874 = vadd.f32 %v765, %v873
  %v875 = vpop.f32.mrf.mxu0
  %876 = vmatprep.mubr.bf16.mxu0 0
  %877 = vmatmul.mubr.bf16.gmra.mxu0 %v597
  %v878 = vpop.f32.mrf.mxu0
  %v879 = vadd.f32 %v770, %v878
  %v880 = vpop.f32.mrf.mxu0
  %v881 = vpop.f32.mrf.mxu0
  %v882 = vadd.f32 %v773, %v881
  %v883 = vpop.f32.mrf.mxu0
  %884 = vmatprep.mubr.bf16.mxu0 0
  %885 = vmatmul.mubr.bf16.gmra.mxu0 %v600
  %v886 = vpop.f32.mrf.mxu0
  %v887 = vadd.f32 %v778, %v886
  %v888 = vpop.f32.mrf.mxu0
  %v889 = vpop.f32.mrf.mxu0
  %v890 = vadd.f32 %v781, %v889
  %v891 = vpop.f32.mrf.mxu0
  %892 = vmatprep.mubr.bf16.mxu0 0
  %893 = vmatmul.mubr.bf16.gmra.mxu0 %v603
  %v894 = vpop.f32.mrf.mxu0
  %v895 = vadd.f32 %v786, %v894
  %v896 = vpop.f32.mrf.mxu0
  %v897 = vpop.f32.mrf.mxu0
  %v898 = vadd.f32 %v789, %v897
  %v899 = vpop.f32.mrf.mxu0
  %900 = vmatprep.mubr.bf16.mxu0 0
  %901 = vmatmul.mubr.bf16.gmra.mxu0 %v606
  %v902 = vpop.f32.mrf.mxu0
  %v903 = vadd.f32 %v794, %v902
  %v904 = vpop.f32.mrf.mxu0
  %v905 = vpop.f32.mrf.mxu0
  %v906 = vadd.f32 %v797, %v905
  %v907 = vpop.f32.mrf.mxu0
  %908 = vmatprep.mubr.bf16.mxu0 0
  %909 = vmatmul.mubr.bf16.gmra.mxu0 %v609
  %v910 = vpop.f32.mrf.mxu0
  %v911 = vadd.f32 %v802, %v910
  %v912 = vpop.f32.mrf.mxu0
  %v913 = vpop.f32.mrf.mxu0
  %v914 = vadd.f32 %v805, %v913
  %v915 = vpop.f32.mrf.mxu0
  %916 = vmatprep.mubr.bf16.mxu0 0
  %917 = vmatmul.mubr.bf16.gmra.mxu0 %v612
  %v918 = vpop.f32.mrf.mxu0
  %v919 = vadd.f32 %v810, %v918
  %v920 = vpop.f32.mrf.mxu0
  %v921 = vpop.f32.mrf.mxu0
  %v922 = vadd.f32 %v813, %v921
  %v923 = vpop.f32.mrf.mxu0
  %924 = vdwg.mxu0
  %v925 = vld [vmem:[%s7] sm:$0x1]
  %v927 = vlaneseq
  %v928 = vshrl.u32 %v927, 7
  %v929 = vsub.s32 0, %v928
  %v930 = vrot.slane %v925, %v929
  %v932 = vadd.f32 %v863, %v930
  %v933 = vadd.f32 %v866, %v930
  %v934 = vadd.f32 %v871, %v930
  %v935 = vadd.f32 %v874, %v930
  %v936 = vadd.f32 %v879, %v930
  %v937 = vadd.f32 %v882, %v930
  %v938 = vadd.f32 %v887, %v930
  %v939 = vadd.f32 %v890, %v930
  %v940 = vadd.f32 %v895, %v930
  %v941 = vadd.f32 %v898, %v930
  %v942 = vadd.f32 %v903, %v930
  %v943 = vadd.f32 %v906, %v930
  %v944 = vadd.f32 %v911, %v930
  %v945 = vadd.f32 %v914, %v930
  %v946 = vadd.f32 %v919, %v930
  %v947 = vadd.f32 %v922, %v930
  %vm948 = vcmask 64512
  %949 = vst.msk [vmem:[%s8] sm:$0xff] %vm948, %v932
  %950 = vst.msk [vmem:[%s8 + $0x8] sm:$0xff] %vm948, %v933
  %951 = vst.msk [vmem:[%s8 + $0x10] sm:$0xff] %vm948, %v934
  %952 = vst.msk [vmem:[%s8 + $0x18] sm:$0xff] %vm948, %v935
  %953 = vst.msk [vmem:[%s8 + $0x20] sm:$0xff] %vm948, %v936
  %954 = vst.msk [vmem:[%s8 + $0x28] sm:$0xff] %vm948, %v937
  %955 = vst.msk [vmem:[%s8 + $0x30] sm:$0xff] %vm948, %v938
  %956 = vst.msk [vmem:[%s8 + $0x38] sm:$0xff] %vm948, %v939
  %957 = vst.msk [vmem:[%s8 + $0x40] sm:$0xff] %vm948, %v940
  %958 = vst.msk [vmem:[%s8 + $0x48] sm:$0xff] %vm948, %v941
  %959 = vst.msk [vmem:[%s8 + $0x50] sm:$0xff] %vm948, %v942
  %960 = vst.msk [vmem:[%s8 + $0x58] sm:$0xff] %vm948, %v943
  %961 = vst.msk [vmem:[%s8 + $0x60] sm:$0xff] %vm948, %v944
  %962 = vst.msk [vmem:[%s8 + $0x68] sm:$0xff] %vm948, %v945
  %963 = vst.msk [vmem:[%s8 + $0x70] sm:$0xff] %vm948, %v946
  %964 = vst.msk [vmem:[%s8 + $0x78] sm:$0xff] %vm948, %v947
  // Predicated region
  $region34: #{chebnet_forward.1} parent=0 // pred_check
    _
  $region35: #{chebnet_forward.1} parent=0 // pred_check_branch
    %966 = sbr.rel (0) target = $region37
  $region36: #{chebnet_forward.1} parent=0 // pred_region
    _
  $region37: #{chebnet_forward.1} parent=0 // pred_fallthru
    _
  // Predicated region
  $region38: #{chebnet_forward.1} parent=0 // pred_check
    _
  $region39: #{chebnet_forward.1} parent=0 // pred_check_branch
    %968 = sbr.rel (0) target = $region41
  $region40: #{chebnet_forward.1} parent=0 // pred_region
    _
  $region41: #{chebnet_forward.1} parent=0 // pred_fallthru
    _

</llo_original>
